<compile_context>
chip_gen: v7x
topology: tpu7x:2x2x1
jax: 0.10.0
libtpu: 0.0.40
codegen_flags: <defaults>
</compile_context>

<pallas_src>
import jax
import jax.numpy as jnp
from jax.experimental import pallas as pl
from jax.experimental.pallas import tpu as pltpu


def _round_up(x, m):
    return ((x + m - 1) // m) * m


def _mol_generator_kernel(z_ref, w1_ref, b1_ref, w2_ref, b2_ref, w3_ref, b3_ref, o_ref):
    # Layer 1: cast z to bf16 in-kernel (fused), MXU matmul with f32 accumulate,
    # then bias + ReLU in f32.
    z = z_ref[...].astype(w1_ref.dtype)
    h1 = jnp.dot(z, w1_ref[...], preferred_element_type=jnp.float32)
    h1 = jnp.maximum(h1 + b1_ref[...], 0.0)

    # Layer 2: Linear + bias + ReLU
    h2 = jnp.dot(h1.astype(w2_ref.dtype), w2_ref[...], preferred_element_type=jnp.float32)
    h2 = jnp.maximum(h2 + b2_ref[...], 0.0)

    # Layer 3: Linear + bias + Sigmoid (true out_dim, no lane padding)
    h3 = jnp.dot(h2.astype(w3_ref.dtype), w3_ref[...], preferred_element_type=jnp.float32)
    o_ref[...] = jax.nn.sigmoid(h3 + b3_ref[...]).astype(o_ref.dtype)


def mol_generator_forward(z, params, *, tile_b=4096, mxu_dtype=jnp.bfloat16):
    """z: [B, input_dim] float32.
    params: dict of w1,b1,w2,b2,w3,b3 with weights [in, out] and biases [1, out]."""
    w1, b1, w2, b2, w3, b3 = (params[k] for k in ("w1", "b1", "w2", "b2", "w3", "b3"))
    B, in_dim = z.shape
    hid1 = w1.shape[1]
    hid2 = w2.shape[1]
    out_dim = w3.shape[1]

    # --- batch padding: only to the sublane multiple of 8 (never to a full tile) ---
    b_pad = _round_up(B, 8)
    if b_pad != B:
        z = jnp.zeros((b_pad, in_dim), z.dtype).at[:B].set(z)

    # --- tile selection: big tiles amortize ~0.35us/step overhead; cap so the grid
    #     keeps >=4 steps for large batches (v7x megacore sharding of the batch axis) ---
    tb = min(tile_b, b_pad, max(8, _round_up(pl.cdiv(b_pad, 4), 8)))
    grid = (pl.cdiv(b_pad, tb),)          # partial trailing tile handled by Pallas

    # --- weights/biases: tiny & resident, cast once here (bf16 MXU weights, f32 biases) ---
    w1m, w2m, w3m = (w.astype(mxu_dtype) for w in (w1, w2, w3))
    b1f, b2f, b3f = (b.astype(jnp.float32) for b in (b1, b2, b3))

    def resident(shape):
        # constant index_map -> same block every grid step -> stays VMEM-resident
        return pl.BlockSpec(shape, lambda i: (0, 0))

    # Advisory cost estimate (true out_dim, f32 z read, bf16 weights, f32 out write).
    flops = 2 * b_pad * (in_dim * hid1 + hid1 * hid2 + hid2 * out_dim)
    transcendentals = b_pad * out_dim     # sigmoid -> exp per output element
    resident_args = (w1m, b1f, w2m, b2f, w3m, b3f)
    bytes_accessed = (
        b_pad * in_dim * 4                 # z (f32) in
        + b_pad * out_dim * 4              # out (f32) write
        + sum(int(a.size) * a.dtype.itemsize for a in resident_args)
    )

    out = pl.pallas_call(
        _mol_generator_kernel,
        out_shape=jax.ShapeDtypeStruct((b_pad, out_dim), jnp.float32),
        grid=grid,
        in_specs=[
            pl.BlockSpec((tb, in_dim), lambda i: (i, 0)),   # z: f32, tiled over batch
            resident(w1m.shape), resident(b1f.shape),
            resident(w2m.shape), resident(b2f.shape),
            resident(w3m.shape), resident(b3f.shape),
        ],
        out_specs=pl.BlockSpec((tb, out_dim), lambda i: (i, 0)),
        compiler_params=pltpu.CompilerParams(
            dimension_semantics=("parallel",),          # batch axis -> shard across TCs
            vmem_limit_bytes=32 * 1024 * 1024,          # safe on v5e/v6e/v7x; usage is tiny
        ),
        cost_estimate=pl.CostEstimate(
            flops=flops, transcendentals=transcendentals, bytes_accessed=bytes_accessed
        ),
    )(z, w1m, b1f, w2m, b2f, w3m, b3f)

    return out[:B] if b_pad != B else out


def init_params(key, input_dim, hidden_dim, output_dim):
    """Deterministic init matching the shapes of the PyTorch module.
    PyTorch nn.Linear stores W as [out, in]; we store the transpose [in, out]."""
    dims = [
        (input_dim, hidden_dim),          # fc1
        (hidden_dim, hidden_dim * 2),     # fc2
        (hidden_dim * 2, output_dim),     # fc3
    ]
    params = {}
    for i, (fan_in, fan_out) in enumerate(dims, start=1):
        key, kw, kb = jax.random.split(key, 3)
        bound = 1.0 / jnp.sqrt(fan_in)    # PyTorch default U(-1/sqrt(fan_in), 1/sqrt(fan_in))
        params[f"w{i}"] = jax.random.uniform(kw, (fan_in, fan_out), jnp.float32, -bound, bound)
        params[f"b{i}"] = jax.random.uniform(kb, (1, fan_out), jnp.float32, -bound, bound)
    return params


if __name__ == "__main__":
    input_dim, hidden_dim, output_dim = 16, 32, 16
    batch = 8

    key = jax.random.PRNGKey(0)
    key, kz = jax.random.split(key)
    z = jax.random.normal(kz, (batch, input_dim), jnp.float32)

    params = init_params(key, input_dim, hidden_dim, output_dim)

    out = mol_generator_forward(z, params)
    out = jax.block_until_ready(out)

    # reference in plain JAX (full f32)
    ref = z
    ref = jnp.maximum(ref @ params["w1"] + params["b1"], 0.0)
    ref = jnp.maximum(ref @ params["w2"] + params["b2"], 0.0)
    ref = jax.nn.sigmoid(ref @ params["w3"] + params["b3"])

    assert out.shape == (batch, output_dim)
    # bf16 MXU inputs -> loosened tolerance (f32 accumulation keeps error small)
    assert jnp.allclose(out, ref, atol=2e-2), "mismatch vs reference"

    print("KERNEL_OK")
</pallas_src>

<mosaic_0001>
module attributes {stable_mosaic.version = 11 : i64} {
  func.func @_mol_generator_kernel(%arg0: i32, %arg1: memref<8x16xf32, #tpu.memory_space<vmem>>, %arg2: memref<16x32xbf16, #tpu.memory_space<vmem>>, %arg3: memref<1x32xf32, #tpu.memory_space<vmem>>, %arg4: memref<32x64xbf16, #tpu.memory_space<vmem>>, %arg5: memref<1x64xf32, #tpu.memory_space<vmem>>, %arg6: memref<64x16xbf16, #tpu.memory_space<vmem>>, %arg7: memref<1x16xf32, #tpu.memory_space<vmem>>, %arg8: memref<8x16xf32, #tpu.memory_space<vmem>>) attributes {dimension_semantics = [#tpu.dimension_semantics<parallel>], iteration_bounds = array<i64: 1>, scalar_prefetch = 0 : i64, scratch_operands = 0 : i64, tpu.core_type = #tpu.core_type<tc>, window_params = [{transform_indices = @transform_0, window_bounds = array<i64: 8, 16>}, {pipeline_mode = #tpu.pipeline_mode<synchronous>, transform_indices = @transform_1, window_bounds = array<i64: 16, 32>}, {pipeline_mode = #tpu.pipeline_mode<synchronous>, transform_indices = @transform_2, window_bounds = array<i64: 1, 32>}, {pipeline_mode = #tpu.pipeline_mode<synchronous>, transform_indices = @transform_3, window_bounds = array<i64: 32, 64>}, {pipeline_mode = #tpu.pipeline_mode<synchronous>, transform_indices = @transform_4, window_bounds = array<i64: 1, 64>}, {pipeline_mode = #tpu.pipeline_mode<synchronous>, transform_indices = @transform_5, window_bounds = array<i64: 64, 16>}, {pipeline_mode = #tpu.pipeline_mode<synchronous>, transform_indices = @transform_6, window_bounds = array<i64: 1, 16>}, {transform_indices = @transform_7, window_bounds = array<i64: 8, 16>}]} {
    %c0 = arith.constant 0 : index
    %c0_0 = arith.constant 0 : index
    %0 = vector.load %arg1[%c0, %c0_0] : memref<8x16xf32, #tpu.memory_space<vmem>>, vector<8x16xf32>
    %1 = arith.truncf %0 : vector<8x16xf32> to vector<8x16xbf16>
    %c0_1 = arith.constant 0 : index
    %c0_2 = arith.constant 0 : index
    %2 = vector.load %arg2[%c0_1, %c0_2] : memref<16x32xbf16, #tpu.memory_space<vmem>>, vector<16x32xbf16>
    %cst = arith.constant dense<0.000000e+00> : vector<8x32xf32>
    %3 = tpu.matmul %1, %2, %cst {dimension_numbers = #tpu.dot_dimension_numbers<[1], [0], [0], [1], [0, 0, 1, 1], [], []>} : vector<8x16xbf16>, vector<16x32xbf16>, vector<8x32xf32> -> vector<8x32xf32>
    %c0_3 = arith.constant 0 : index
    %c0_4 = arith.constant 0 : index
    %4 = vector.load %arg3[%c0_3, %c0_4] : memref<1x32xf32, #tpu.memory_space<vmem>>, vector<1x32xf32>
    %5 = vector.broadcast %4 : vector<1x32xf32> to vector<8x32xf32>
    %6 = arith.addf %3, %5 : vector<8x32xf32>
    %cst_5 = arith.constant 0.000000e+00 : f32
    %7 = vector.broadcast %cst_5 : f32 to vector<8x32xf32>
    %8 = arith.maximumf %6, %7 : vector<8x32xf32>
    %9 = arith.truncf %8 : vector<8x32xf32> to vector<8x32xbf16>
    %c0_6 = arith.constant 0 : index
    %c0_7 = arith.constant 0 : index
    %10 = vector.load %arg4[%c0_6, %c0_7] : memref<32x64xbf16, #tpu.memory_space<vmem>>, vector<32x64xbf16>
    %cst_8 = arith.constant dense<0.000000e+00> : vector<8x64xf32>
    %11 = tpu.matmul %9, %10, %cst_8 {dimension_numbers = #tpu.dot_dimension_numbers<[1], [0], [0], [1], [0, 0, 1, 1], [], []>} : vector<8x32xbf16>, vector<32x64xbf16>, vector<8x64xf32> -> vector<8x64xf32>
    %c0_9 = arith.constant 0 : index
    %c0_10 = arith.constant 0 : index
    %12 = vector.load %arg5[%c0_9, %c0_10] : memref<1x64xf32, #tpu.memory_space<vmem>>, vector<1x64xf32>
    %13 = vector.broadcast %12 : vector<1x64xf32> to vector<8x64xf32>
    %14 = arith.addf %11, %13 : vector<8x64xf32>
    %cst_11 = arith.constant 0.000000e+00 : f32
    %15 = vector.broadcast %cst_11 : f32 to vector<8x64xf32>
    %16 = arith.maximumf %14, %15 : vector<8x64xf32>
    %17 = arith.truncf %16 : vector<8x64xf32> to vector<8x64xbf16>
    %c0_12 = arith.constant 0 : index
    %c0_13 = arith.constant 0 : index
    %18 = vector.load %arg6[%c0_12, %c0_13] : memref<64x16xbf16, #tpu.memory_space<vmem>>, vector<64x16xbf16>
    %cst_14 = arith.constant dense<0.000000e+00> : vector<8x16xf32>
    %19 = tpu.matmul %17, %18, %cst_14 {dimension_numbers = #tpu.dot_dimension_numbers<[1], [0], [0], [1], [0, 0, 1, 1], [], []>} : vector<8x64xbf16>, vector<64x16xbf16>, vector<8x16xf32> -> vector<8x16xf32>
    %c0_15 = arith.constant 0 : index
    %c0_16 = arith.constant 0 : index
    %20 = vector.load %arg7[%c0_15, %c0_16] : memref<1x16xf32, #tpu.memory_space<vmem>>, vector<1x16xf32>
    %21 = vector.broadcast %20 : vector<1x16xf32> to vector<8x16xf32>
    %22 = arith.addf %19, %21 : vector<8x16xf32>
    %23 = arith.negf %22 : vector<8x16xf32>
    %24 = math.exp %23 : vector<8x16xf32>
    %cst_17 = arith.constant 1.000000e+00 : f32
    %25 = vector.broadcast %cst_17 : f32 to vector<8x16xf32>
    %26 = arith.addf %25, %24 : vector<8x16xf32>
    %27 = arith.divf %25, %26 : vector<8x16xf32>
    %c0_18 = arith.constant 0 : index
    %c0_19 = arith.constant 0 : index
    %28 = vector.load %arg8[%c0_18, %c0_19] : memref<8x16xf32, #tpu.memory_space<vmem>>, vector<8x16xf32>
    tpu.vector_store %arg8[%c0_18, %c0_19], %27 {strides = array<i32>} : memref<8x16xf32, #tpu.memory_space<vmem>>, vector<8x16xf32>,
    return
  }
  func.func @transform_0(%arg0: i32) -> (i32, i32) {
    %c0_i32 = arith.constant 0 : i32
    %c0_i32_0 = arith.constant 0 : i32
    return %arg0, %c0_i32 : i32, i32
  }
  func.func @transform_1(%arg0: i32) -> (i32, i32) {
    %c0_i32 = arith.constant 0 : i32
    %c0_i32_0 = arith.constant 0 : i32
    %c0_i32_1 = arith.constant 0 : i32
    return %c0_i32, %c0_i32_0 : i32, i32
  }
  func.func @transform_2(%arg0: i32) -> (i32, i32) {
    %c0_i32 = arith.constant 0 : i32
    %c0_i32_0 = arith.constant 0 : i32
    %c0_i32_1 = arith.constant 0 : i32
    return %c0_i32, %c0_i32_0 : i32, i32
  }
  func.func @transform_3(%arg0: i32) -> (i32, i32) {
    %c0_i32 = arith.constant 0 : i32
    %c0_i32_0 = arith.constant 0 : i32
    %c0_i32_1 = arith.constant 0 : i32
    return %c0_i32, %c0_i32_0 : i32, i32
  }
  func.func @transform_4(%arg0: i32) -> (i32, i32) {
    %c0_i32 = arith.constant 0 : i32
    %c0_i32_0 = arith.constant 0 : i32
    %c0_i32_1 = arith.constant 0 : i32
    return %c0_i32, %c0_i32_0 : i32, i32
  }
  func.func @transform_5(%arg0: i32) -> (i32, i32) {
    %c0_i32 = arith.constant 0 : i32
    %c0_i32_0 = arith.constant 0 : i32
    %c0_i32_1 = arith.constant 0 : i32
    return %c0_i32, %c0_i32_0 : i32, i32
  }
  func.func @transform_6(%arg0: i32) -> (i32, i32) {
    %c0_i32 = arith.constant 0 : i32
    %c0_i32_0 = arith.constant 0 : i32
    %c0_i32_1 = arith.constant 0 : i32
    return %c0_i32, %c0_i32_0 : i32, i32
  }
  func.func @transform_7(%arg0: i32) -> (i32, i32) {
    %c0_i32 = arith.constant 0 : i32
    %c0_i32_0 = arith.constant 0 : i32
    return %arg0, %c0_i32 : i32, i32
  }
}

</mosaic_0001>

<llo_original>
// kernel: tpu_custom_call.1
$region0: #{tpu_custom_call.1}
  #allocation0 [shape = 'u32[]', space=smem, size = 0x4, offset = 0x4, fixed_abs, tag = 'smem constant byte address 0x4 - core index']
  #allocation1 [shape = 'u32[144,128]{1,0:T(1,128)}', space=vmem, size = 0x12000, scoped, tag = 'internal scratch']
  %s0 = inlined_call_operand.vmem [shape: f32[8,16], index: 0, kind: input, shape index: {}]
  %s1 = inlined_call_operand.vmem [shape: bf16[16,32], index: 1, kind: input, shape index: {}]
  %s2 = inlined_call_operand.vmem [shape: f32[1,32], index: 2, kind: input, shape index: {}]
  %s3 = inlined_call_operand.vmem [shape: bf16[32,64], index: 3, kind: input, shape index: {}]
  %s4 = inlined_call_operand.vmem [shape: f32[1,64], index: 4, kind: input, shape index: {}]
  %s5 = inlined_call_operand.vmem [shape: bf16[64,16], index: 5, kind: input, shape index: {}]
  %s6 = inlined_call_operand.vmem [shape: f32[1,16], index: 6, kind: input, shape index: {}]
  %s7 = inlined_call_operand.hbm [shape: f32[8,16], index: 7, kind: output, shape index: {}]
  %s8 = sld [smem:[#allocation0]]
  $region38: #{tpu_custom_call.1} parent=0
    _
  %s10 = ssub.s32 1, %s8
  %s11 = scalar_select 0, %s10, %s8
  $region1: #{tpu_custom_call.1} parent=0
    #allocation2 [shape = 'u8[4096]{0}', space=vmem, size = 0x1000, scoped, tag = 'output window, operand 0, single buffered']
    #allocation3 [shape = 's32[1]{0}', space=sflag, size = 0x4, scoped, tag = 'scoped memory for tpu_custom_call.1']
    %12 = vsyncpa [#allocation3], 0
    // Predicated region
    $region2: #{tpu_custom_call.1} parent=1 // pred_check
      _
    $region3: #{tpu_custom_call.1} parent=1 // pred_check_branch
      %14 = sbr.rel (0) target = $region5
    $region4: #{tpu_custom_call.1} parent=1 // pred_region
      _
    $region5: #{tpu_custom_call.1} parent=1 // pred_fallthru
      _
    // Predicated region
    $region6: #{tpu_custom_call.1} parent=1 // pred_check
      _
    $region7: #{tpu_custom_call.1} parent=1 // pred_check_branch
      %16 = sbr.rel (0) target = $region9
    $region8: #{tpu_custom_call.1} parent=1 // pred_region
      _
    $region9: #{tpu_custom_call.1} parent=1 // pred_fallthru
      _
    // Predicated region
    $region10: #{tpu_custom_call.1} parent=1 // pred_check
      _
    $region11: #{tpu_custom_call.1} parent=1 // pred_check_branch
      %18 = sbr.rel (0) target = $region13
    $region12: #{tpu_custom_call.1} parent=1 // pred_region
      _
    $region13: #{tpu_custom_call.1} parent=1 // pred_fallthru
      _
    // Predicated region
    $region14: #{tpu_custom_call.1} parent=1 // pred_check
      _
    $region15: #{tpu_custom_call.1} parent=1 // pred_check_branch
      %20 = sbr.rel (0) target = $region17
    $region16: #{tpu_custom_call.1} parent=1 // pred_region
      _
    $region17: #{tpu_custom_call.1} parent=1 // pred_fallthru
      _
    // Predicated region
    $region18: #{tpu_custom_call.1} parent=1 // pred_check
      _
    $region19: #{tpu_custom_call.1} parent=1 // pred_check_branch
      %22 = sbr.rel (0) target = $region21
    $region20: #{tpu_custom_call.1} parent=1 // pred_region
      _
    $region21: #{tpu_custom_call.1} parent=1 // pred_fallthru
      _
    // Predicated region
    $region22: #{tpu_custom_call.1} parent=1 // pred_check
      _
    $region23: #{tpu_custom_call.1} parent=1 // pred_check_branch
      %24 = sbr.rel (0) target = $region25
    $region24: #{tpu_custom_call.1} parent=1 // pred_region
      _
    $region25: #{tpu_custom_call.1} parent=1 // pred_fallthru
      _
    // Predicated region
    $region26: #{tpu_custom_call.1} parent=1 // pred_check
      _
    $region27: #{tpu_custom_call.1} parent=1 // pred_check_branch
      %26 = sbr.rel (0) target = $region29
    $region28: #{tpu_custom_call.1} parent=1 // pred_region
      _
    $region29: #{tpu_custom_call.1} parent=1 // pred_fallthru
      _
    %v28 = vld [vmem:[%s0] sm:$0xff]
    %v29 = vpack.c.bf16 %v28, %v28
    %v30 = vld [vmem:[%s1] sm:$0xf]
    %v31 = vld [vmem:[%s1 + $0x4] sm:$0xf]
    %v32 = vld [vmem:[%s2] sm:$0x1]
    %v34 = vlaneseq
    %v35 = vshrl.u32 %v34, 7
    %v36 = vsub.s32 0, %v35
    %v37 = vrot.slane %v32, %v36
    %v41 = vunpack.c.l.b16 %v30
    %v42 = vunpack.c.l.b16 %v31
    %v43 = vpack.c.b16 %v42, %v41
    %vm45 = vcmask 130048
    %v47 = vsel %vm45, %v29, 0
    %49 = vmatprep.subr.bf16.mxu0 0
    %50 = vmatpush1.bf16.msra.mxu0 %v43
    %51 = vmatprep.subr.bf16.mxu0 0
    %52 = vmatpush1.bf16.msra.mxu0 0
    %53 = vmatprep.subr.bf16.mxu0 0
    %54 = vmatpush1.bf16.msra.mxu0 0
    %55 = vmatprep.subr.bf16.mxu0 0
    %56 = vmatpush1.bf16.msra.mxu0 0
    %57 = vmatprep.subr.bf16.mxu0 0
    %58 = vmatpush1.bf16.msra.mxu0 0
    %59 = vmatprep.subr.bf16.mxu0 0
    %60 = vmatpush1.bf16.msra.mxu0 0
    %61 = vmatprep.subr.bf16.mxu0 0
    %62 = vmatpush1.bf16.msra.mxu0 0
    %63 = vmatprep.subr.bf16.mxu0 0
    %64 = vmatpush1.bf16.msra.mxu0 0
    %65 = vmatprep.subr.bf16.mxu0 0
    %66 = vmatpush1.bf16.msra.mxu0 0
    %67 = vmatprep.subr.bf16.mxu0 0
    %68 = vmatpush1.bf16.msra.mxu0 0
    %69 = vmatprep.subr.bf16.mxu0 0
    %70 = vmatpush1.bf16.msra.mxu0 0
    %71 = vmatprep.subr.bf16.mxu0 0
    %72 = vmatpush1.bf16.msra.mxu0 0
    %73 = vmatprep.subr.bf16.mxu0 0
    %74 = vmatpush1.bf16.msra.mxu0 0
    %75 = vmatprep.subr.bf16.mxu0 0
    %76 = vmatpush1.bf16.msra.mxu0 0
    %77 = vmatprep.subr.bf16.mxu0 0
    %78 = vmatpush1.bf16.msra.mxu0 0
    %79 = vmatprep.subr.bf16.mxu0 0
    %80 = vmatpush1.bf16.msra.mxu0 0
    %81 = vmatprep.mubr.bf16.mxu0 0
    %82 = vmatmul.mubr.bf16.gmra.mrb[0].mxu0 %v47
    %v83 = vpop.f32.mrb[0].mxu0
    %v84 = vadd.f32 %v37, %v83
    %v85 = vpop.f32.mrb[0].mxu0
    %v86 = vpop.f32.mrb[0].mxu0
    %v87 = vpop.f32.mrb[0].mxu0
    %88 = vdwg.mxu0
    %v89 = vmax.f32 %v84, 0.0
    %v90 = vpack.c.bf16 %v89, %v89
    %v91 = vld [vmem:[%s3] sm:$0xf]
    %v92 = vld [vmem:[%s3 + $0x4] sm:$0xf]
    %v93 = vld [vmem:[%s3 + $0x8] sm:$0xf]
    %v94 = vld [vmem:[%s3 + $0xc] sm:$0xf]
    %v95 = vld [vmem:[%s4] sm:$0x1]
    %v97 = vlaneseq
    %v98 = vshrl.u32 %v97, 7
    %v99 = vsub.s32 0, %v98
    %v100 = vrot.slane %v95, %v99
    %v106 = vunpack.c.l.b16 %v91
    %v107 = vunpack.c.l.b16 %v92
    %v108 = vunpack.c.l.b16 %v93
    %v109 = vunpack.c.l.b16 %v94
    %v110 = vpack.c.b16 %v107, %v106
    %v111 = vpack.c.b16 %v109, %v108
    %vm114 = vcmask 261120
    %v116 = vsel %vm114, %v90, 0
    %118 = vmatprep.subr.bf16.mxu0 0
    %119 = vmatpush1.bf16.msra.mxu0 %v110
    %120 = vmatprep.subr.bf16.mxu0 0
    %121 = vmatpush1.bf16.msra.mxu0 %v111
    %122 = vmatprep.subr.bf16.mxu0 0
    %123 = vmatpush1.bf16.msra.mxu0 0
    %124 = vmatprep.subr.bf16.mxu0 0
    %125 = vmatpush1.bf16.msra.mxu0 0
    %126 = vmatprep.subr.bf16.mxu0 0
    %127 = vmatpush1.bf16.msra.mxu0 0
    %128 = vmatprep.subr.bf16.mxu0 0
    %129 = vmatpush1.bf16.msra.mxu0 0
    %130 = vmatprep.subr.bf16.mxu0 0
    %131 = vmatpush1.bf16.msra.mxu0 0
    %132 = vmatprep.subr.bf16.mxu0 0
    %133 = vmatpush1.bf16.msra.mxu0 0
    %134 = vmatprep.subr.bf16.mxu0 0
    %135 = vmatpush1.bf16.msra.mxu0 0
    %136 = vmatprep.subr.bf16.mxu0 0
    %137 = vmatpush1.bf16.msra.mxu0 0
    %138 = vmatprep.subr.bf16.mxu0 0
    %139 = vmatpush1.bf16.msra.mxu0 0
    %140 = vmatprep.subr.bf16.mxu0 0
    %141 = vmatpush1.bf16.msra.mxu0 0
    %142 = vmatprep.subr.bf16.mxu0 0
    %143 = vmatpush1.bf16.msra.mxu0 0
    %144 = vmatprep.subr.bf16.mxu0 0
    %145 = vmatpush1.bf16.msra.mxu0 0
    %146 = vmatprep.subr.bf16.mxu0 0
    %147 = vmatpush1.bf16.msra.mxu0 0
    %148 = vmatprep.subr.bf16.mxu0 0
    %149 = vmatpush1.bf16.msra.mxu0 0
    %150 = vmatprep.mubr.bf16.mxu0 0
    %151 = vmatmul.mubr.bf16.gmra.mrb[0].mxu0 %v116
    %v152 = vpop.f32.mrb[0].mxu0
    %v153 = vadd.f32 %v100, %v152
    %v154 = vpop.f32.mrb[0].mxu0
    %v155 = vpop.f32.mrb[0].mxu0
    %v156 = vpop.f32.mrb[0].mxu0
    %157 = vdwg.mxu0
    %v158 = vmax.f32 %v153, 0.0
    %v159 = vpack.c.bf16 %v158, %v158
    %v160 = vld [vmem:[%s5] sm:$0xf]
    %v161 = vld [vmem:[%s5 + $0x4] sm:$0xf]
    %v162 = vld [vmem:[%s5 + $0x8] sm:$0xf]
    %v163 = vld [vmem:[%s5 + $0xc] sm:$0xf]
    %v164 = vld [vmem:[%s5 + $0x10] sm:$0xf]
    %v165 = vld [vmem:[%s5 + $0x14] sm:$0xf]
    %v166 = vld [vmem:[%s5 + $0x18] sm:$0xf]
    %v167 = vld [vmem:[%s5 + $0x1c] sm:$0xf]
    %v168 = vld [vmem:[%s6] sm:$0x1]
    %v170 = vlaneseq
    %v171 = vshrl.u32 %v170, 7
    %v172 = vsub.s32 0, %v171
    %v173 = vrot.slane %v168, %v172
    %v183 = vunpack.c.l.b16 %v160
    %v184 = vunpack.c.l.b16 %v161
    %v185 = vunpack.c.l.b16 %v162
    %v186 = vunpack.c.l.b16 %v163
    %v187 = vunpack.c.l.b16 %v164
    %v188 = vunpack.c.l.b16 %v165
    %v189 = vunpack.c.l.b16 %v166
    %v190 = vunpack.c.l.b16 %v167
    %v191 = vpack.c.b16 %v184, %v183
    %v192 = vpack.c.b16 %v186, %v185
    %v193 = vpack.c.b16 %v188, %v187
    %v194 = vpack.c.b16 %v190, %v189
    %vm199 = vcmask 523264
    %v201 = vsel %vm199, %v159, 0
    %203 = vmatprep.subr.bf16.mxu0 0
    %204 = vmatpush1.bf16.msra.mxu0 %v191
    %205 = vmatprep.subr.bf16.mxu0 0
    %206 = vmatpush1.bf16.msra.mxu0 %v192
    %207 = vmatprep.subr.bf16.mxu0 0
    %208 = vmatpush1.bf16.msra.mxu0 %v193
    %209 = vmatprep.subr.bf16.mxu0 0
    %210 = vmatpush1.bf16.msra.mxu0 %v194
    %211 = vmatprep.subr.bf16.mxu0 0
    %212 = vmatpush1.bf16.msra.mxu0 0
    %213 = vmatprep.subr.bf16.mxu0 0
    %214 = vmatpush1.bf16.msra.mxu0 0
    %215 = vmatprep.subr.bf16.mxu0 0
    %216 = vmatpush1.bf16.msra.mxu0 0
    %217 = vmatprep.subr.bf16.mxu0 0
    %218 = vmatpush1.bf16.msra.mxu0 0
    %219 = vmatprep.subr.bf16.mxu0 0
    %220 = vmatpush1.bf16.msra.mxu0 0
    %221 = vmatprep.subr.bf16.mxu0 0
    %222 = vmatpush1.bf16.msra.mxu0 0
    %223 = vmatprep.subr.bf16.mxu0 0
    %224 = vmatpush1.bf16.msra.mxu0 0
    %225 = vmatprep.subr.bf16.mxu0 0
    %226 = vmatpush1.bf16.msra.mxu0 0
    %227 = vmatprep.subr.bf16.mxu0 0
    %228 = vmatpush1.bf16.msra.mxu0 0
    %229 = vmatprep.subr.bf16.mxu0 0
    %230 = vmatpush1.bf16.msra.mxu0 0
    %231 = vmatprep.subr.bf16.mxu0 0
    %232 = vmatpush1.bf16.msra.mxu0 0
    %233 = vmatprep.subr.bf16.mxu0 0
    %234 = vmatpush1.bf16.msra.mxu0 0
    %235 = vmatprep.mubr.bf16.mxu0 0
    %236 = vmatmul.mubr.bf16.gmra.mrb[0].mxu0 %v201
    %v237 = vpop.f32.mrb[0].mxu0
    %v238 = vadd.f32 %v173, %v237
    %v239 = vpop.f32.mrb[0].mxu0
    %v240 = vpop.f32.mrb[0].mxu0
    %v241 = vpop.f32.mrb[0].mxu0
    %242 = vdwg.mxu0
    %v243 = vxor.u32 %v238, 2147483648
    %v244 = vmul.f32 %v243, 1.442695
    %v245 = vpow.pop %v244
    %v246 = vadd.f32 %v245, 1.0
    %v247 = vrcp.pop %v246
    %v248 = vmul.f32 1.0, %v247
    %249 = vst.msk [vmem:[#allocation2] sm:$0xff] %vm45, %v248
    // Predicated region
    $region30: #{tpu_custom_call.1} parent=1 // pred_check
      _
    $region31: #{tpu_custom_call.1} parent=1 // pred_check_branch
      %251 = sbr.rel (0) target = $region33
    $region32: #{tpu_custom_call.1} parent=1 // pred_region
      %s253 = ssub.s32 128, 128
      %254 = vsyncadd [#allocation3], %s253
      %s256 = sshll.u32 [#allocation2], 4
      %s257 = int_to_ptr.vmem [resolvable:$true] %s256
      %259 = dma.vmem_to_hbm [thread:$0]  %s257, 128, %s7, [#allocation3]
    $region33: #{tpu_custom_call.1} parent=1 // pred_fallthru
      _
    // Predicated region
    $region34: #{tpu_custom_call.1} parent=1 // pred_check
      _
    $region35: #{tpu_custom_call.1} parent=1 // pred_check_branch
      %261 = sbr.rel (0) target = $region37
    $region36: #{tpu_custom_call.1} parent=1 // pred_region
      %262 = dma.done [#allocation3], 128
    $region37: #{tpu_custom_call.1} parent=1 // pred_fallthru
      _
    %263 = vsyncpa [#allocation3], 1

</llo_original>
